<compile_context>
chip_gen: v5e
topology: v5e:2x2
jax: 0.10.0
libtpu: 0.0.40
codegen_flags: <defaults>
</compile_context>

<pallas_src>
import numpy as np
import jax
import jax.numpy as jnp
from jax.experimental import pallas as pl
from jax.experimental.pallas import tpu as pltpu


_LANES = 128                    # lane-dense last dim -> full vregs, unmasked vst
_TARGET_BLOCK_BYTES = 2 << 20   # ~2 MiB per block per buffer


def _round_up(a, b):
    return (a + b - 1) // b * b


# ----------------------------- kernel ---------------------------------------

def _mish_kernel(x_ref, o_ref):
    # Load in native dtype, compute in f32.
    x = x_ref[...].astype(jnp.float32)
    # Mish(x) = x * tanh(softplus(x)), rewritten with a single exp:
    #   w = exp(x);  tanh(softplus(x)) = w*(w+2) / (w*(w+2) + 2)
    xc = jnp.minimum(x, 20.0)              # overflow guard (tanh(sp(x)) == 1 beyond)
    w = jnp.exp(xc)                        # 1 EUP transcendental / element
    p = w * (w + 2.0)
    d = p + 2.0                            # >= 2, well conditioned
    r = pl.reciprocal(d, approx=True)      # EUP approx reciprocal (cheap slot)
    r = r * (2.0 - d * r)                  # one Newton step -> ~f32-exact
    y = x * (p * r)
    y = jnp.where(x > 20.0, x, y)
    o_ref[...] = y.astype(o_ref.dtype)


# ------------------------- plain-jnp fallback math ----------------------------

def _mish_jnp(x):
    xf = x.astype(jnp.float32)
    return (xf * jnp.tanh(jax.nn.softplus(xf))).astype(x.dtype)


# ----------------------------- wrapper ----------------------------------------

@jax.jit
def mish_forward(x):
    """Elementwise Mish on a tensor of any shape (matches nn.Module forward)."""
    orig_shape = x.shape
    dtype = x.dtype
    n = int(np.prod(orig_shape))

    flat = jnp.ravel(x)
    n_main = (n // _LANES) * _LANES

    if n_main == 0:
        # Tiny input (< one vreg row): not worth a kernel launch.
        return _mish_jnp(flat).reshape(orig_shape)

    rows = n_main // _LANES
    itemsize = jnp.dtype(dtype).itemsize
    max_tile_rows = max(16, (_TARGET_BLOCK_BYTES // (_LANES * itemsize)) // 16 * 16)

    if rows <= 16:
        tile_rows = rows                     # block == full array dims (always legal)
    else:
        # >= ~4 grid steps on large inputs (keeps both v7x TCs fed via the
        # "parallel" axis), capped at ~2 MiB blocks; ragged final block is OK.
        tile_rows = min(max_tile_rows,
                        _round_up(pl.cdiv(rows, 4), 16),
                        _round_up(rows, 16))
    grid = (pl.cdiv(rows, tile_rows),)

    slab = (flat if n_main == n else flat[:n_main]).reshape(rows, _LANES)

    out = pl.pallas_call(
        _mish_kernel,
        out_shape=jax.ShapeDtypeStruct((rows, _LANES), dtype),
        grid=grid,
        in_specs=[pl.BlockSpec((tile_rows, _LANES), lambda i: (i, 0))],
        out_specs=pl.BlockSpec((tile_rows, _LANES), lambda i: (i, 0)),
        compiler_params=pltpu.CompilerParams(
            dimension_semantics=("parallel",)),
        cost_estimate=pl.CostEstimate(
            flops=9 * n_main,
            transcendentals=2 * n_main,
            bytes_accessed=2 * n_main * itemsize),
    )(slab)

    out_flat = out.reshape(-1)
    if n_main != n:
        # Rare ragged tail (< 128 elements): plain jnp, then concat.
        out_flat = jnp.concatenate([out_flat, _mish_jnp(flat[n_main:])])
    return out_flat.reshape(orig_shape)


# --------------------------- pure-JAX reference --------------------------------

def _reference(x):
    xf = x.astype(jnp.float32)
    return (xf * jnp.tanh(jax.nn.softplus(xf))).astype(x.dtype)


# ----------------------------- main --------------------------------------------

if __name__ == "__main__":
    key = jax.random.PRNGKey(0)
    # Shape consistent with the CSPDarknet usage of Mish: (N, C, H, W).
    x = 3.0 * jax.random.normal(key, (2, 4, 16, 16), jnp.float32)
    # Exercise the large-|x| guard paths explicitly.
    x = x.at[0, 0, 0, 0].set(30.0)
    x = x.at[0, 0, 0, 1].set(-30.0)
    x = x.at[0, 0, 0, 2].set(90.0)   # exp would overflow without the clamp

    out = jax.block_until_ready(mish_forward(x))
    ref = jax.block_until_ready(_reference(x))
    np.testing.assert_allclose(np.asarray(out), np.asarray(ref),
                               rtol=1e-4, atol=1e-5)

    # bf16 I/O path (native-dtype HBM streaming, f32 math inside the kernel).
    xb = x.astype(jnp.bfloat16)
    out_b = jax.block_until_ready(mish_forward(xb))
    ref_b = jax.block_until_ready(_reference(xb))
    np.testing.assert_allclose(np.asarray(out_b, dtype=np.float32),
                               np.asarray(ref_b, dtype=np.float32),
                               rtol=2e-2, atol=2e-2)

    # Odd-size input exercises the sub-128-element plain-jnp tail path.
    xo = 3.0 * jax.random.normal(jax.random.PRNGKey(1), (7, 37), jnp.float32)
    out_o = jax.block_until_ready(mish_forward(xo))
    ref_o = jax.block_until_ready(_reference(xo))
    np.testing.assert_allclose(np.asarray(out_o), np.asarray(ref_o),
                               rtol=1e-4, atol=1e-5)

    print("KERNEL_OK")
</pallas_src>

<mosaic_0001>
module attributes {stable_mosaic.version = 11 : i64} {
  func.func @_mish_kernel(%arg0: i32, %arg1: memref<16x128xf32, #tpu.memory_space<vmem>>, %arg2: memref<16x128xf32, #tpu.memory_space<vmem>>) attributes {dimension_semantics = [#tpu.dimension_semantics<parallel>], iteration_bounds = array<i64: 1>, scalar_prefetch = 0 : i64, scratch_operands = 0 : i64, tpu.core_type = #tpu.core_type<tc>, window_params = [{transform_indices = @transform_0, window_bounds = array<i64: 16, 128>}, {transform_indices = @transform_1, window_bounds = array<i64: 16, 128>}]} {
    %c0 = arith.constant 0 : index
    %c0_0 = arith.constant 0 : index
    %0 = vector.load %arg1[%c0, %c0_0] : memref<16x128xf32, #tpu.memory_space<vmem>>, vector<16x128xf32>
    %cst = arith.constant 2.000000e+01 : f32
    %1 = vector.broadcast %cst : f32 to vector<16x128xf32>
    %2 = arith.minimumf %0, %1 : vector<16x128xf32>
    %3 = math.exp %2 : vector<16x128xf32>
    %cst_1 = arith.constant 2.000000e+00 : f32
    %4 = vector.broadcast %cst_1 : f32 to vector<16x128xf32>
    %5 = arith.addf %3, %4 : vector<16x128xf32>
    %6 = arith.mulf %3, %5 : vector<16x128xf32>
    %cst_2 = arith.constant 2.000000e+00 : f32
    %7 = vector.broadcast %cst_2 : f32 to vector<16x128xf32>
    %8 = arith.addf %6, %7 : vector<16x128xf32>
    %9 = tpu.reciprocal %8 {approx = true} : vector<16x128xf32> -> vector<16x128xf32>
    %10 = arith.mulf %8, %9 : vector<16x128xf32>
    %cst_3 = arith.constant 2.000000e+00 : f32
    %11 = vector.broadcast %cst_3 : f32 to vector<16x128xf32>
    %12 = arith.subf %11, %10 : vector<16x128xf32>
    %13 = arith.mulf %9, %12 : vector<16x128xf32>
    %14 = arith.mulf %6, %13 : vector<16x128xf32>
    %15 = arith.mulf %0, %14 : vector<16x128xf32>
    %cst_4 = arith.constant 2.000000e+01 : f32
    %16 = vector.broadcast %cst_4 : f32 to vector<16x128xf32>
    %17 = arith.cmpf ogt, %0, %16 : vector<16x128xf32>
    %18 = arith.select %17, %0, %15 : vector<16x128xi1>, vector<16x128xf32>
    %c0_5 = arith.constant 0 : index
    %c0_6 = arith.constant 0 : index
    %19 = vector.load %arg2[%c0_5, %c0_6] : memref<16x128xf32, #tpu.memory_space<vmem>>, vector<16x128xf32>
    tpu.vector_store %arg2[%c0_5, %c0_6], %18 {strides = array<i32>} : memref<16x128xf32, #tpu.memory_space<vmem>>, vector<16x128xf32>,
    return
  }
  func.func @transform_0(%arg0: i32) -> (i32, i32) {
    %c0_i32 = arith.constant 0 : i32
    %c0_i32_0 = arith.constant 0 : i32
    return %arg0, %c0_i32 : i32, i32
  }
  func.func @transform_1(%arg0: i32) -> (i32, i32) {
    %c0_i32 = arith.constant 0 : i32
    %c0_i32_0 = arith.constant 0 : i32
    return %arg0, %c0_i32 : i32, i32
  }
}

</mosaic_0001>

<llo_original>
// kernel: mish_forward.1
$region0: #{mish_forward.1}
  #allocation0 [shape = 'u32[]', space=smem, size = 0x4, offset = 0x4, fixed_abs, tag = 'smem constant byte address 0x4 - core index']
  #allocation1 [shape = 'u32[72,128]{1,0:T(1,128)}', space=vmem, size = 0x9000, scoped, tag = 'internal scratch']
  %s0 = inlined_call_operand.vmem [shape: f32[16,128], index: 0, kind: input, shape index: {}]
  %s1 = inlined_call_operand.vmem [shape: f32[16,128], index: 1, kind: output, shape index: {}]
  %s2 = sld [smem:[#allocation0]]
  $region14: #{mish_forward.1} parent=0
    _
  %s4 = ssub.s32 1, %s2
  %s5 = scalar_select 0, %s4, %s2
  // Predicated region
  $region2: #{mish_forward.1} parent=0 // pred_check
    _
  $region3: #{mish_forward.1} parent=0 // pred_check_branch
    %7 = sbr.rel (0) target = $region5
  $region4: #{mish_forward.1} parent=0 // pred_region
    _
  $region5: #{mish_forward.1} parent=0 // pred_fallthru
    _
  %v8 = vld [vmem:[%s0] sm:$0xff]
  %v9 = vld [vmem:[%s0 + $0x8] sm:$0xff]
  %v10 = vmin.f32 %v8, 20.0
  %v11 = vmin.f32 %v9, 20.0
  %v12 = vmul.f32 %v10, 1.442695
  %v13 = vpow.pop %v12
  %v14 = vmul.f32 %v11, 1.442695
  %v15 = vpow.pop %v14
  %v16 = vadd.f32 %v13, 2.0
  %v17 = vadd.f32 %v15, 2.0
  %v18 = vmul.f32 %v13, %v16
  %v19 = vmul.f32 %v15, %v17
  %v20 = vadd.f32 %v18, 2.0
  %v21 = vadd.f32 %v19, 2.0
  %v22 = vrcp.pop %v20
  %v23 = vrcp.pop %v21
  %v24 = vmul.f32 %v20, %v22
  %v25 = vmul.f32 %v21, %v23
  %v26 = vsub.f32 2.0, %v24
  %v27 = vsub.f32 2.0, %v25
  %v28 = vmul.f32 %v22, %v26
  %v29 = vmul.f32 %v23, %v27
  %v30 = vmul.f32 %v18, %v28
  %v31 = vmul.f32 %v19, %v29
  %v32 = vmul.f32 %v8, %v30
  %v33 = vmul.f32 %v9, %v31
  %vm34 = vcmp.gt.f32.partialorder %v8, 20.0
  %vm35 = vcmp.gt.f32.partialorder %v9, 20.0
  %v36 = vsel %vm34, %v8, %v32
  %v37 = vsel %vm35, %v9, %v33
  %38 = vst [vmem:[%s1] sm:$0xff] %v36
  %39 = vst [vmem:[%s1 + $0x8] sm:$0xff] %v37
  // Predicated region
  $region6: #{mish_forward.1} parent=0 // pred_check
    _
  $region7: #{mish_forward.1} parent=0 // pred_check_branch
    %41 = sbr.rel (0) target = $region9
  $region8: #{mish_forward.1} parent=0 // pred_region
    _
  $region9: #{mish_forward.1} parent=0 // pred_fallthru
    _
  // Predicated region
  $region10: #{mish_forward.1} parent=0 // pred_check
    _
  $region11: #{mish_forward.1} parent=0 // pred_check_branch
    %43 = sbr.rel (0) target = $region13
  $region12: #{mish_forward.1} parent=0 // pred_region
    _
  $region13: #{mish_forward.1} parent=0 // pred_fallthru
    _

</llo_original>
